<compile_context>
chip_gen: v5e
topology: v5e:2x2
jax: 0.10.0
libtpu: 0.0.40
codegen_flags: <defaults>
</compile_context>

<pallas_src>
import functools

import jax
import jax.numpy as jnp
from jax import lax
from jax.experimental import pallas as pl
from jax.experimental.pallas import tpu as pltpu


def _contract(w, x, use_mxu):
    """(O, K) @ (K, L) -> (O, L) in f32.  MXU dot for deep K, VPU multiply-adds for tiny K."""
    if use_mxu:
        return jnp.dot(w, x.astype(w.dtype), preferred_element_type=jnp.float32)
    acc = w[:, 0:1].astype(jnp.float32) * x[0:1, :]
    for k in range(1, w.shape[1]):
        acc = acc + w[:, k:k + 1].astype(jnp.float32) * x[k:k + 1, :]
    return acc


def _resblock_kernel(x_ref, halo_ref, w1_ref, b_ref, w2_ref, o_ref, *, W, Ht,
                     use_mxu1, use_mxu2):
    """One (image n, H-tile t) grid step.

    x_ref:    (C, Ht*W)   input tile, flat row-major rows (lane-dense).
    halo_ref: (C, 2*W)    x rows just above / below the tile (edge rows clamped).
    w1_ref:   (C2, C)     conv1x1 weight, BN1 scale folded in.
    b_ref:    (C2+C, 1)   packed f32 biases [b1; b2] (folded BN shifts).
    w2_ref:   (C, 9*C2)   conv3x3 weight, column order (ky, kx, cin), BN2 scale folded in.
    o_ref:    (C, Ht*W)   output tile.
    """
    f32 = jnp.float32
    C2, C = w1_ref.shape
    L_out = Ht * W
    L_f = (Ht + 2) * W

    t = pl.program_id(1)
    last_t = pl.num_programs(1) - 1

    # ---- assemble the halo-extended input frame: [row above | tile rows | row below].
    x_mid = x_ref[...].astype(f32)                                # (C, Ht*W); reused for residual
    x_top = halo_ref[:, 0:W].astype(f32)                          # (C, W)
    x_bot = halo_ref[:, W:2 * W].astype(f32)                      # (C, W)
    x_frame = jnp.concatenate([x_top, x_mid, x_bot], axis=1)      # (C, (Ht+2)*W)

    # ---- conv1x1 (BN1 scale pre-folded) + bias + LeakyReLU(0.1) over the frame.
    h = _contract(w1_ref[...], x_frame, use_mxu1)                 # (C2, L_f) f32
    h = h + b_ref[0:C2, :]
    h = jnp.maximum(h, 0.1 * h)

    # The 3x3 conv zero-pads the *hidden* map: zero halo rows that fall outside the image.
    pos = lax.broadcasted_iota(jnp.int32, (1, L_f), 1)
    pad = jnp.logical_or(jnp.logical_and(t == 0, pos < W),
                         jnp.logical_and(t == last_t, pos >= L_f - W))
    h = jnp.where(pad, 0.0, h)

    # ---- conv3x3 (BN2 scale pre-folded): 9 accumulated taps, each a lane-shifted static
    # slice of the flat hidden frame.  One zero column on each side keeps every slice in
    # bounds; the row-wrapped elements those zeros stand in for are column-masked anyway.
    zcol = jnp.zeros((C2, 1), f32)
    h_ext = jnp.concatenate([zcol, h, zcol], axis=1)              # (C2, L_f + 2)
    col = lax.broadcasted_iota(jnp.int32, (1, L_out), 1) % W      # hoisted out of the tap loop
    m_left = col >= 1                                             # valid lanes for kx == 0 taps
    m_right = col <= W - 2                                        # valid lanes for kx == 2 taps

    w2 = w2_ref[...]
    y = None
    for k in range(9):
        ky, kx = divmod(k, 3)
        tap = h_ext[:, ky * W + kx: ky * W + kx + L_out]          # (C2, Ht*W)
        if kx == 0:
            tap = jnp.where(m_left, tap, 0.0)
        elif kx == 2:
            tap = jnp.where(m_right, tap, 0.0)
        contrib = _contract(w2[:, k * C2:(k + 1) * C2], tap, use_mxu2)
        y = contrib if y is None else y + contrib                 # (C, Ht*W) f32 accumulator

    y = y + b_ref[C2:C2 + C, :]
    y = jnp.maximum(y, 0.1 * y)

    o_ref[...] = (y + x_mid).astype(o_ref.dtype)                  # residual add, lane-dense store


def _pick_block_h(H, W, C, itemsize, budget_bytes=4 << 20):
    """Largest H-tile with (Ht*W) % 128 == 0 (lane-dense blocks) that still yields >= 2
    grid steps along H (pipelining depth / megacore) and a bounded per-tile footprint."""
    cands = [h for h in range(1, H + 1)
             if H % h == 0 and ((h * W) % 128 == 0 or h == H)]
    good = [h for h in cands if H // h >= 2 and 2 * C * h * W * itemsize <= budget_bytes]
    if good:
        return max(good)
    multi = [h for h in cands if H // h >= 2]
    return min(multi) if multi else max(cands)


def res_block_pallas(x_nchw, w1, s1, b1, w2, s2, b2, *, block_h=None, use_bf16=True,
                     out_dtype=None, vmem_limit_bytes=None):
    """x_nchw: (N, C, H, W).  w1: (C//2, C, 1, 1), w2: (C, C//2, 3, 3) (PyTorch OIHW).
    s*/b* are folded eval-mode BatchNorm scale/shift per channel."""
    N, C, H, W = x_nchw.shape
    C2 = w1.shape[0]
    HW = H * W
    out_dtype = x_nchw.dtype if out_dtype is None else out_dtype
    f32 = jnp.float32

    Ht = _pick_block_h(H, W, C, x_nchw.dtype.itemsize) if block_h is None else block_h
    assert H % Ht == 0 and ((Ht * W) % 128 == 0 or Ht == H)
    T = H // Ht

    # x streamed as lane-dense (C, Ht*W) tiles.  The one-row top/bottom halo each tile
    # needs is a tiny gathered side input (edge tiles get a clamped row; the kernel zeroes
    # its hidden activations to realize the conv's zero padding).  Layout plumbing only.
    x_flat = x_nchw.reshape(N, C, HW)
    t_idx = jnp.arange(T)
    top = x_nchw[:, :, jnp.maximum(t_idx * Ht - 1, 0), :]         # (N, C, T, W)
    bot = x_nchw[:, :, jnp.minimum(t_idx * Ht + Ht, H - 1), :]    # (N, C, T, W)
    halo = jnp.concatenate([top, bot], axis=-1).transpose(0, 2, 1, 3)   # (N, T, C, 2W)

    # MXU only pays off with a reasonably deep contraction; tiny K runs on the VPU.
    use_mxu1 = C >= 32
    use_mxu2 = C2 >= 32

    # Fold BN scales into the conv weights in f32 (exact); pre-cast MXU-path weights to
    # bf16 in the wrapper (halves streamed weight bytes); biases stay f32, packed together.
    w1_k = w1.reshape(C2, C).astype(f32) * s1[:, None].astype(f32)
    w2_k = (jnp.transpose(w2, (0, 2, 3, 1)).reshape(C, 9 * C2).astype(f32)
            * s2[:, None].astype(f32))                            # columns ordered (ky, kx, cin)
    if use_bf16 and use_mxu1:
        w1_k = w1_k.astype(jnp.bfloat16)
    if use_bf16 and use_mxu2:
        w2_k = w2_k.astype(jnp.bfloat16)
    b_k = jnp.concatenate([b1.reshape(C2), b2.reshape(C)]).astype(f32)[:, None]

    kernel = functools.partial(_resblock_kernel, W=W, Ht=Ht,
                               use_mxu1=use_mxu1, use_mxu2=use_mxu2)
    const = lambda shape: pl.BlockSpec(shape, lambda n, t: (0,) * len(shape))

    cp = dict(dimension_semantics=("parallel", "parallel"))
    if vmem_limit_bytes is not None:   # raise the scoped VMEM limit when scaling tiles up
        cp["vmem_limit_bytes"] = vmem_limit_bytes

    out = pl.pallas_call(
        kernel,
        out_shape=jax.ShapeDtypeStruct((N, C, HW), out_dtype),
        grid=(N, T),
        in_specs=[
            pl.BlockSpec((pl.Squeezed(), C, Ht * W), lambda n, t: (n, 0, t)),   # x tile
            pl.BlockSpec((pl.Squeezed(), pl.Squeezed(), C, 2 * W),
                         lambda n, t: (n, t, 0, 0)),                            # halo rows
            const((C2, C)),                                                     # w1 (folded)
            const((C2 + C, 1)),                                                 # [b1; b2]
            const((C, 9 * C2)),                                                 # w2 (folded)
        ],
        out_specs=pl.BlockSpec((pl.Squeezed(), C, Ht * W), lambda n, t: (n, 0, t)),
        compiler_params=pltpu.CompilerParams(**cp),
    )(x_flat, halo, w1_k, b_k, w2_k)

    return out.reshape(N, C, H, W)


def res_block_ref(x, w1, s1, b1, w2, s2, b2):
    """Pure-JAX NCHW reference matching the PyTorch module (eval-mode BN)."""
    h = lax.conv_general_dilated(x, w1, (1, 1), 'VALID',
                                 dimension_numbers=('NCHW', 'OIHW', 'NCHW'))
    h = h * s1[None, :, None, None] + b1[None, :, None, None]
    h = jnp.maximum(h, 0.1 * h)
    h2 = lax.conv_general_dilated(h, w2, (1, 1), ((1, 1), (1, 1)),
                                  dimension_numbers=('NCHW', 'OIHW', 'NCHW'))
    h2 = h2 * s2[None, :, None, None] + b2[None, :, None, None]
    h2 = jnp.maximum(h2, 0.1 * h2)
    return h2 + x


if __name__ == "__main__":
    N, C, H, W = 2, 4, 16, 16
    C2 = C // 2
    eps = 1e-5

    key = jax.random.PRNGKey(0)
    ks = jax.random.split(key, 11)

    x = jax.random.normal(ks[0], (N, C, H, W), jnp.float32)

    # Conv weights (PyTorch OIHW shapes), deterministic init.
    w1 = 0.5 * jax.random.normal(ks[1], (C2, C, 1, 1), jnp.float32)
    w2 = 0.25 * jax.random.normal(ks[2], (C, C2, 3, 3), jnp.float32)

    # BatchNorm params + running stats (eval semantics), folded to per-channel scale/shift.
    gamma1 = 0.5 + jax.random.uniform(ks[3], (C2,), jnp.float32)
    beta1 = 0.1 * jax.random.normal(ks[4], (C2,), jnp.float32)
    mean1 = 0.1 * jax.random.normal(ks[5], (C2,), jnp.float32)
    var1 = 0.5 + jax.random.uniform(ks[6], (C2,), jnp.float32)
    gamma2 = 0.5 + jax.random.uniform(ks[7], (C,), jnp.float32)
    beta2 = 0.1 * jax.random.normal(ks[8], (C,), jnp.float32)
    mean2 = 0.1 * jax.random.normal(ks[9], (C,), jnp.float32)
    var2 = 0.5 + jax.random.uniform(ks[10], (C,), jnp.float32)

    s1 = gamma1 / jnp.sqrt(var1 + eps)
    b1 = beta1 - mean1 * s1
    s2 = gamma2 / jnp.sqrt(var2 + eps)
    b2 = beta2 - mean2 * s2

    ref = res_block_ref(x, w1, s1, b1, w2, s2, b2)

    # f32 I/O path: tight tolerance against the pure-JAX reference.
    run_f32 = jax.jit(functools.partial(res_block_pallas, use_bf16=False))
    out_f32 = jax.block_until_ready(run_f32(x, w1, s1, b1, w2, s2, b2))
    assert out_f32.shape == (N, C, H, W) and out_f32.dtype == jnp.float32
    err32 = jnp.max(jnp.abs(out_f32 - ref))
    assert jnp.allclose(out_f32, ref, atol=1e-3, rtol=1e-3), f"f32 path max err {err32}"

    # bf16-I/O path (halved HBM traffic; in-kernel math stays f32): looser tolerance.
    run_bf16 = jax.jit(functools.partial(res_block_pallas, use_bf16=True,
                                         out_dtype=jnp.bfloat16))
    out_bf16 = jax.block_until_ready(
        run_bf16(x.astype(jnp.bfloat16), w1, s1, b1, w2, s2, b2))
    assert out_bf16.shape == (N, C, H, W) and out_bf16.dtype == jnp.bfloat16
    err16 = jnp.max(jnp.abs(out_bf16.astype(jnp.float32) - ref))
    assert jnp.allclose(out_bf16.astype(jnp.float32), ref, atol=1e-1, rtol=5e-2), \
        f"bf16 path max err {err16}"

    print("KERNEL_OK")
</pallas_src>

<mosaic_0001>
module attributes {stable_mosaic.version = 11 : i64} {
  func.func @_resblock_kernel(%arg0: i32, %arg1: i32, %arg2: memref<1x4x128xf32, #tpu.memory_space<vmem>>, %arg3: memref<1x1x4x32xf32, #tpu.memory_space<vmem>>, %arg4: memref<2x4xf32, #tpu.memory_space<vmem>>, %arg5: memref<6x1xf32, #tpu.memory_space<vmem>>, %arg6: memref<4x18xf32, #tpu.memory_space<vmem>>, %arg7: memref<1x4x128xf32, #tpu.memory_space<vmem>>) attributes {dimension_semantics = [#tpu.dimension_semantics<parallel>, #tpu.dimension_semantics<parallel>], iteration_bounds = array<i64: 2, 2>, scalar_prefetch = 0 : i64, scratch_operands = 0 : i64, tpu.core_type = #tpu.core_type<tc>, window_params = [{transform_indices = @transform_0, window_bounds = array<i64: 1, 4, 128>}, {transform_indices = @transform_1, window_bounds = array<i64: 1, 1, 4, 32>}, {pipeline_mode = #tpu.pipeline_mode<synchronous>, transform_indices = @transform_2, window_bounds = array<i64: 2, 4>}, {pipeline_mode = #tpu.pipeline_mode<synchronous>, transform_indices = @transform_3, window_bounds = array<i64: 6, 1>}, {pipeline_mode = #tpu.pipeline_mode<synchronous>, transform_indices = @transform_4, window_bounds = array<i64: 4, 18>}, {transform_indices = @transform_5, window_bounds = array<i64: 1, 4, 128>}]} {
    %c0 = arith.constant 0 : index
    %c0_0 = arith.constant 0 : index
    %c0_1 = arith.constant 0 : index
    %0 = vector.load %arg2[%c0, %c0_0, %c0_1] : memref<1x4x128xf32, #tpu.memory_space<vmem>>, vector<1x4x128xf32>
    %1 = vector.shape_cast %0 : vector<1x4x128xf32> to vector<4x128xf32>
    %c0_2 = arith.constant 0 : index
    %c0_3 = arith.constant 0 : index
    %c0_4 = arith.constant 0 : index
    %c0_5 = arith.constant 0 : index
    %2 = vector.load %arg3[%c0_2, %c0_3, %c0_4, %c0_5] : memref<1x1x4x32xf32, #tpu.memory_space<vmem>>, vector<1x1x4x16xf32>
    %3 = vector.shape_cast %2 : vector<1x1x4x16xf32> to vector<4x16xf32>
    %c0_6 = arith.constant 0 : index
    %c0_7 = arith.constant 0 : index
    %c0_8 = arith.constant 0 : index
    %c16 = arith.constant 16 : index
    %4 = vector.load %arg3[%c0_6, %c0_7, %c0_8, %c16] : memref<1x1x4x32xf32, #tpu.memory_space<vmem>>, vector<1x1x4x16xf32>
    %5 = vector.shape_cast %4 : vector<1x1x4x16xf32> to vector<4x16xf32>
    %6 = tpu.concatenate %3, %1, %5 in 1 : vector<4x16xf32>, vector<4x128xf32>, vector<4x16xf32> -> vector<4x160xf32>
    %c0_9 = arith.constant 0 : index
    %c0_10 = arith.constant 0 : index
    %7 = vector.load %arg4[%c0_9, %c0_10] : memref<2x4xf32, #tpu.memory_space<vmem>>, vector<2x4xf32>
    %8 = vector.extract_strided_slice %7 {offsets = [0, 0], sizes = [2, 1], strides = [1, 1]} : vector<2x4xf32> to vector<2x1xf32>
    %9 = vector.extract_strided_slice %6 {offsets = [0, 0], sizes = [1, 160], strides = [1, 1]} : vector<4x160xf32> to vector<1x160xf32>
    %10 = vector.broadcast %8 : vector<2x1xf32> to vector<2x160xf32>
    %11 = vector.broadcast %9 : vector<1x160xf32> to vector<2x160xf32>
    %12 = arith.mulf %10, %11 : vector<2x160xf32>
    %13 = vector.extract_strided_slice %7 {offsets = [0, 1], sizes = [2, 1], strides = [1, 1]} : vector<2x4xf32> to vector<2x1xf32>
    %14 = vector.extract_strided_slice %6 {offsets = [1, 0], sizes = [1, 160], strides = [1, 1]} : vector<4x160xf32> to vector<1x160xf32>
    %15 = vector.broadcast %13 : vector<2x1xf32> to vector<2x160xf32>
    %16 = vector.broadcast %14 : vector<1x160xf32> to vector<2x160xf32>
    %17 = arith.mulf %15, %16 : vector<2x160xf32>
    %18 = arith.addf %12, %17 : vector<2x160xf32>
    %19 = vector.extract_strided_slice %7 {offsets = [0, 2], sizes = [2, 1], strides = [1, 1]} : vector<2x4xf32> to vector<2x1xf32>
    %20 = vector.extract_strided_slice %6 {offsets = [2, 0], sizes = [1, 160], strides = [1, 1]} : vector<4x160xf32> to vector<1x160xf32>
    %21 = vector.broadcast %19 : vector<2x1xf32> to vector<2x160xf32>
    %22 = vector.broadcast %20 : vector<1x160xf32> to vector<2x160xf32>
    %23 = arith.mulf %21, %22 : vector<2x160xf32>
    %24 = arith.addf %18, %23 : vector<2x160xf32>
    %25 = vector.extract_strided_slice %7 {offsets = [0, 3], sizes = [2, 1], strides = [1, 1]} : vector<2x4xf32> to vector<2x1xf32>
    %26 = vector.extract_strided_slice %6 {offsets = [3, 0], sizes = [1, 160], strides = [1, 1]} : vector<4x160xf32> to vector<1x160xf32>
    %27 = vector.broadcast %25 : vector<2x1xf32> to vector<2x160xf32>
    %28 = vector.broadcast %26 : vector<1x160xf32> to vector<2x160xf32>
    %29 = arith.mulf %27, %28 : vector<2x160xf32>
    %30 = arith.addf %24, %29 : vector<2x160xf32>
    %c0_11 = arith.constant 0 : index
    %c0_12 = arith.constant 0 : index
    %31 = vector.load %arg5[%c0_11, %c0_12] : memref<6x1xf32, #tpu.memory_space<vmem>>, vector<2x1xf32>
    %32 = vector.broadcast %31 : vector<2x1xf32> to vector<2x160xf32>
    %33 = arith.addf %30, %32 : vector<2x160xf32>
    %cst = arith.constant 1.000000e-01 : f32
    %34 = vector.broadcast %cst : f32 to vector<2x160xf32>
    %35 = arith.mulf %34, %33 : vector<2x160xf32>
    %36 = arith.maximumf %33, %35 : vector<2x160xf32>
    %37 = tpu.iota {dimensions = array<i32: 1>} : vector<1x160xi32>
    %c0_i32 = arith.constant 0 : i32
    %38 = arith.cmpi eq, %arg1, %c0_i32 : i32
    %c16_i32 = arith.constant 16 : i32
    %39 = vector.broadcast %c16_i32 : i32 to vector<1x160xi32>
    %40 = arith.cmpi slt, %37, %39 : vector<1x160xi32>
    %41 = vector.broadcast %38 : i1 to vector<1x160xi1>
    %42 = arith.andi %41, %40 : vector<1x160xi1>
    %c1_i32 = arith.constant 1 : i32
    %43 = arith.cmpi eq, %arg1, %c1_i32 : i32
    %c144_i32 = arith.constant 144 : i32
    %44 = vector.broadcast %c144_i32 : i32 to vector<1x160xi32>
    %45 = arith.cmpi sge, %37, %44 : vector<1x160xi32>
    %46 = vector.broadcast %43 : i1 to vector<1x160xi1>
    %47 = arith.andi %46, %45 : vector<1x160xi1>
    %48 = arith.ori %42, %47 : vector<1x160xi1>
    %cst_13 = arith.constant 0.000000e+00 : f32
    %49 = vector.shape_cast %48 : vector<1x160xi1> to vector<1x160xi1>
    %50 = vector.broadcast %49 : vector<1x160xi1> to vector<2x160xi1>
    %51 = vector.broadcast %cst_13 : f32 to vector<2x160xf32>
    %52 = arith.select %50, %51, %36 : vector<2x160xi1>, vector<2x160xf32>
    %cst_14 = arith.constant 0.000000e+00 : f32
    %53 = vector.broadcast %cst_14 : f32 to vector<2x1xf32>
    %54 = tpu.concatenate %53, %52, %53 in 1 : vector<2x1xf32>, vector<2x160xf32>, vector<2x1xf32> -> vector<2x162xf32>
    %55 = tpu.iota {dimensions = array<i32: 1>} : vector<1x128xi32>
    %c16_i32_15 = arith.constant 16 : i32
    %c0_i32_16 = arith.constant 0 : i32
    %56 = arith.cmpi eq, %c16_i32_15, %c0_i32_16 : i32
    %c1_i32_17 = arith.constant 1 : i32
    %57 = arith.select %56, %c1_i32_17, %c16_i32_15 : i32
    %58 = vector.broadcast %57 : i32 to vector<1x128xi32>
    %59 = arith.remsi %55, %58 : vector<1x128xi32>
    %c0_i32_18 = arith.constant 0 : i32
    %60 = vector.broadcast %c0_i32_18 : i32 to vector<1x128xi32>
    %61 = arith.cmpi ne, %59, %60 : vector<1x128xi32>
    %c0_i32_19 = arith.constant 0 : i32
    %62 = vector.broadcast %c0_i32_19 : i32 to vector<1x128xi32>
    %63 = arith.cmpi slt, %59, %62 : vector<1x128xi32>
    %c0_i32_20 = arith.constant 0 : i32
    %64 = arith.cmpi slt, %57, %c0_i32_20 : i32
    %65 = vector.broadcast %64 : i1 to vector<1x128xi1>
    %66 = vector.broadcast %65 : vector<1x128xi1> to vector<1x128xi1>
    %67 = arith.xori %63, %66 : vector<1x128xi1>
    %68 = arith.andi %67, %61 : vector<1x128xi1>
    %69 = vector.broadcast %57 : i32 to vector<1x128xi32>
    %70 = arith.addi %59, %69 : vector<1x128xi32>
    %71 = arith.select %68, %70, %59 : vector<1x128xi1>, vector<1x128xi32>
    %c1_i32_21 = arith.constant 1 : i32
    %72 = vector.broadcast %c1_i32_21 : i32 to vector<1x128xi32>
    %73 = arith.cmpi sge, %71, %72 : vector<1x128xi32>
    %c14_i32 = arith.constant 14 : i32
    %74 = vector.broadcast %c14_i32 : i32 to vector<1x128xi32>
    %75 = arith.cmpi sle, %71, %74 : vector<1x128xi32>
    %c0_22 = arith.constant 0 : index
    %c0_23 = arith.constant 0 : index
    %76 = vector.load %arg6[%c0_22, %c0_23] : memref<4x18xf32, #tpu.memory_space<vmem>>, vector<4x18xf32>
    %77 = vector.extract_strided_slice %54 {offsets = [0, 0], sizes = [2, 128], strides = [1, 1]} : vector<2x162xf32> to vector<2x128xf32>
    %cst_24 = arith.constant 0.000000e+00 : f32
    %78 = vector.shape_cast %73 : vector<1x128xi1> to vector<1x128xi1>
    %79 = vector.broadcast %78 : vector<1x128xi1> to vector<2x128xi1>
    %80 = vector.broadcast %cst_24 : f32 to vector<2x128xf32>
    %81 = arith.select %79, %77, %80 : vector<2x128xi1>, vector<2x128xf32>
    %82 = vector.extract_strided_slice %76 {offsets = [0, 0], sizes = [4, 2], strides = [1, 1]} : vector<4x18xf32> to vector<4x2xf32>
    %83 = vector.extract_strided_slice %82 {offsets = [0, 0], sizes = [4, 1], strides = [1, 1]} : vector<4x2xf32> to vector<4x1xf32>
    %84 = vector.extract_strided_slice %81 {offsets = [0, 0], sizes = [1, 128], strides = [1, 1]} : vector<2x128xf32> to vector<1x128xf32>
    %85 = vector.broadcast %83 : vector<4x1xf32> to vector<4x128xf32>
    %86 = vector.broadcast %84 : vector<1x128xf32> to vector<4x128xf32>
    %87 = arith.mulf %85, %86 : vector<4x128xf32>
    %88 = vector.extract_strided_slice %82 {offsets = [0, 1], sizes = [4, 1], strides = [1, 1]} : vector<4x2xf32> to vector<4x1xf32>
    %89 = vector.extract_strided_slice %81 {offsets = [1, 0], sizes = [1, 128], strides = [1, 1]} : vector<2x128xf32> to vector<1x128xf32>
    %90 = vector.broadcast %88 : vector<4x1xf32> to vector<4x128xf32>
    %91 = vector.broadcast %89 : vector<1x128xf32> to vector<4x128xf32>
    %92 = arith.mulf %90, %91 : vector<4x128xf32>
    %93 = arith.addf %87, %92 : vector<4x128xf32>
    %94 = vector.extract_strided_slice %54 {offsets = [0, 1], sizes = [2, 128], strides = [1, 1]} : vector<2x162xf32> to vector<2x128xf32>
    %95 = vector.extract_strided_slice %76 {offsets = [0, 2], sizes = [4, 2], strides = [1, 1]} : vector<4x18xf32> to vector<4x2xf32>
    %96 = vector.extract_strided_slice %95 {offsets = [0, 0], sizes = [4, 1], strides = [1, 1]} : vector<4x2xf32> to vector<4x1xf32>
    %97 = vector.extract_strided_slice %94 {offsets = [0, 0], sizes = [1, 128], strides = [1, 1]} : vector<2x128xf32> to vector<1x128xf32>
    %98 = vector.broadcast %96 : vector<4x1xf32> to vector<4x128xf32>
    %99 = vector.broadcast %97 : vector<1x128xf32> to vector<4x128xf32>
    %100 = arith.mulf %98, %99 : vector<4x128xf32>
    %101 = vector.extract_strided_slice %95 {offsets = [0, 1], sizes = [4, 1], strides = [1, 1]} : vector<4x2xf32> to vector<4x1xf32>
    %102 = vector.extract_strided_slice %94 {offsets = [1, 0], sizes = [1, 128], strides = [1, 1]} : vector<2x128xf32> to vector<1x128xf32>
    %103 = vector.broadcast %101 : vector<4x1xf32> to vector<4x128xf32>
    %104 = vector.broadcast %102 : vector<1x128xf32> to vector<4x128xf32>
    %105 = arith.mulf %103, %104 : vector<4x128xf32>
    %106 = arith.addf %100, %105 : vector<4x128xf32>
    %107 = arith.addf %93, %106 : vector<4x128xf32>
    %108 = vector.extract_strided_slice %54 {offsets = [0, 2], sizes = [2, 128], strides = [1, 1]} : vector<2x162xf32> to vector<2x128xf32>
    %cst_25 = arith.constant 0.000000e+00 : f32
    %109 = vector.shape_cast %75 : vector<1x128xi1> to vector<1x128xi1>
    %110 = vector.broadcast %109 : vector<1x128xi1> to vector<2x128xi1>
    %111 = vector.broadcast %cst_25 : f32 to vector<2x128xf32>
    %112 = arith.select %110, %108, %111 : vector<2x128xi1>, vector<2x128xf32>
    %113 = vector.extract_strided_slice %76 {offsets = [0, 4], sizes = [4, 2], strides = [1, 1]} : vector<4x18xf32> to vector<4x2xf32>
    %114 = vector.extract_strided_slice %113 {offsets = [0, 0], sizes = [4, 1], strides = [1, 1]} : vector<4x2xf32> to vector<4x1xf32>
    %115 = vector.extract_strided_slice %112 {offsets = [0, 0], sizes = [1, 128], strides = [1, 1]} : vector<2x128xf32> to vector<1x128xf32>
    %116 = vector.broadcast %114 : vector<4x1xf32> to vector<4x128xf32>
    %117 = vector.broadcast %115 : vector<1x128xf32> to vector<4x128xf32>
    %118 = arith.mulf %116, %117 : vector<4x128xf32>
    %119 = vector.extract_strided_slice %113 {offsets = [0, 1], sizes = [4, 1], strides = [1, 1]} : vector<4x2xf32> to vector<4x1xf32>
    %120 = vector.extract_strided_slice %112 {offsets = [1, 0], sizes = [1, 128], strides = [1, 1]} : vector<2x128xf32> to vector<1x128xf32>
    %121 = vector.broadcast %119 : vector<4x1xf32> to vector<4x128xf32>
    %122 = vector.broadcast %120 : vector<1x128xf32> to vector<4x128xf32>
    %123 = arith.mulf %121, %122 : vector<4x128xf32>
    %124 = arith.addf %118, %123 : vector<4x128xf32>
    %125 = arith.addf %107, %124 : vector<4x128xf32>
    %126 = vector.extract_strided_slice %54 {offsets = [0, 16], sizes = [2, 128], strides = [1, 1]} : vector<2x162xf32> to vector<2x128xf32>
    %cst_26 = arith.constant 0.000000e+00 : f32
    %127 = vector.shape_cast %73 : vector<1x128xi1> to vector<1x128xi1>
    %128 = vector.broadcast %127 : vector<1x128xi1> to vector<2x128xi1>
    %129 = vector.broadcast %cst_26 : f32 to vector<2x128xf32>
    %130 = arith.select %128, %126, %129 : vector<2x128xi1>, vector<2x128xf32>
    %131 = vector.extract_strided_slice %76 {offsets = [0, 6], sizes = [4, 2], strides = [1, 1]} : vector<4x18xf32> to vector<4x2xf32>
    %132 = vector.extract_strided_slice %131 {offsets = [0, 0], sizes = [4, 1], strides = [1, 1]} : vector<4x2xf32> to vector<4x1xf32>
    %133 = vector.extract_strided_slice %130 {offsets = [0, 0], sizes = [1, 128], strides = [1, 1]} : vector<2x128xf32> to vector<1x128xf32>
    %134 = vector.broadcast %132 : vector<4x1xf32> to vector<4x128xf32>
    %135 = vector.broadcast %133 : vector<1x128xf32> to vector<4x128xf32>
    %136 = arith.mulf %134, %135 : vector<4x128xf32>
    %137 = vector.extract_strided_slice %131 {offsets = [0, 1], sizes = [4, 1], strides = [1, 1]} : vector<4x2xf32> to vector<4x1xf32>
    %138 = vector.extract_strided_slice %130 {offsets = [1, 0], sizes = [1, 128], strides = [1, 1]} : vector<2x128xf32> to vector<1x128xf32>
    %139 = vector.broadcast %137 : vector<4x1xf32> to vector<4x128xf32>
    %140 = vector.broadcast %138 : vector<1x128xf32> to vector<4x128xf32>
    %141 = arith.mulf %139, %140 : vector<4x128xf32>
    %142 = arith.addf %136, %141 : vector<4x128xf32>
    %143 = arith.addf %125, %142 : vector<4x128xf32>
    %144 = vector.extract_strided_slice %54 {offsets = [0, 17], sizes = [2, 128], strides = [1, 1]} : vector<2x162xf32> to vector<2x128xf32>
    %145 = vector.extract_strided_slice %76 {offsets = [0, 8], sizes = [4, 2], strides = [1, 1]} : vector<4x18xf32> to vector<4x2xf32>
    %146 = vector.extract_strided_slice %145 {offsets = [0, 0], sizes = [4, 1], strides = [1, 1]} : vector<4x2xf32> to vector<4x1xf32>
    %147 = vector.extract_strided_slice %144 {offsets = [0, 0], sizes = [1, 128], strides = [1, 1]} : vector<2x128xf32> to vector<1x128xf32>
    %148 = vector.broadcast %146 : vector<4x1xf32> to vector<4x128xf32>
    %149 = vector.broadcast %147 : vector<1x128xf32> to vector<4x128xf32>
    %150 = arith.mulf %148, %149 : vector<4x128xf32>
    %151 = vector.extract_strided_slice %145 {offsets = [0, 1], sizes = [4, 1], strides = [1, 1]} : vector<4x2xf32> to vector<4x1xf32>
    %152 = vector.extract_strided_slice %144 {offsets = [1, 0], sizes = [1, 128], strides = [1, 1]} : vector<2x128xf32> to vector<1x128xf32>
    %153 = vector.broadcast %151 : vector<4x1xf32> to vector<4x128xf32>
    %154 = vector.broadcast %152 : vector<1x128xf32> to vector<4x128xf32>
    %155 = arith.mulf %153, %154 : vector<4x128xf32>
    %156 = arith.addf %150, %155 : vector<4x128xf32>
    %157 = arith.addf %143, %156 : vector<4x128xf32>
    %158 = vector.extract_strided_slice %54 {offsets = [0, 18], sizes = [2, 128], strides = [1, 1]} : vector<2x162xf32> to vector<2x128xf32>
    %cst_27 = arith.constant 0.000000e+00 : f32
    %159 = vector.shape_cast %75 : vector<1x128xi1> to vector<1x128xi1>
    %160 = vector.broadcast %159 : vector<1x128xi1> to vector<2x128xi1>
    %161 = vector.broadcast %cst_27 : f32 to vector<2x128xf32>
    %162 = arith.select %160, %158, %161 : vector<2x128xi1>, vector<2x128xf32>
    %163 = vector.extract_strided_slice %76 {offsets = [0, 10], sizes = [4, 2], strides = [1, 1]} : vector<4x18xf32> to vector<4x2xf32>
    %164 = vector.extract_strided_slice %163 {offsets = [0, 0], sizes = [4, 1], strides = [1, 1]} : vector<4x2xf32> to vector<4x1xf32>
    %165 = vector.extract_strided_slice %162 {offsets = [0, 0], sizes = [1, 128], strides = [1, 1]} : vector<2x128xf32> to vector<1x128xf32>
    %166 = vector.broadcast %164 : vector<4x1xf32> to vector<4x128xf32>
    %167 = vector.broadcast %165 : vector<1x128xf32> to vector<4x128xf32>
    %168 = arith.mulf %166, %167 : vector<4x128xf32>
    %169 = vector.extract_strided_slice %163 {offsets = [0, 1], sizes = [4, 1], strides = [1, 1]} : vector<4x2xf32> to vector<4x1xf32>
    %170 = vector.extract_strided_slice %162 {offsets = [1, 0], sizes = [1, 128], strides = [1, 1]} : vector<2x128xf32> to vector<1x128xf32>
    %171 = vector.broadcast %169 : vector<4x1xf32> to vector<4x128xf32>
    %172 = vector.broadcast %170 : vector<1x128xf32> to vector<4x128xf32>
    %173 = arith.mulf %171, %172 : vector<4x128xf32>
    %174 = arith.addf %168, %173 : vector<4x128xf32>
    %175 = arith.addf %157, %174 : vector<4x128xf32>
    %176 = vector.extract_strided_slice %54 {offsets = [0, 32], sizes = [2, 128], strides = [1, 1]} : vector<2x162xf32> to vector<2x128xf32>
    %cst_28 = arith.constant 0.000000e+00 : f32
    %177 = vector.shape_cast %73 : vector<1x128xi1> to vector<1x128xi1>
    %178 = vector.broadcast %177 : vector<1x128xi1> to vector<2x128xi1>
    %179 = vector.broadcast %cst_28 : f32 to vector<2x128xf32>
    %180 = arith.select %178, %176, %179 : vector<2x128xi1>, vector<2x128xf32>
    %181 = vector.extract_strided_slice %76 {offsets = [0, 12], sizes = [4, 2], strides = [1, 1]} : vector<4x18xf32> to vector<4x2xf32>
    %182 = vector.extract_strided_slice %181 {offsets = [0, 0], sizes = [4, 1], strides = [1, 1]} : vector<4x2xf32> to vector<4x1xf32>
    %183 = vector.extract_strided_slice %180 {offsets = [0, 0], sizes = [1, 128], strides = [1, 1]} : vector<2x128xf32> to vector<1x128xf32>
    %184 = vector.broadcast %182 : vector<4x1xf32> to vector<4x128xf32>
    %185 = vector.broadcast %183 : vector<1x128xf32> to vector<4x128xf32>
    %186 = arith.mulf %184, %185 : vector<4x128xf32>
    %187 = vector.extract_strided_slice %181 {offsets = [0, 1], sizes = [4, 1], strides = [1, 1]} : vector<4x2xf32> to vector<4x1xf32>
    %188 = vector.extract_strided_slice %180 {offsets = [1, 0], sizes = [1, 128], strides = [1, 1]} : vector<2x128xf32> to vector<1x128xf32>
    %189 = vector.broadcast %187 : vector<4x1xf32> to vector<4x128xf32>
    %190 = vector.broadcast %188 : vector<1x128xf32> to vector<4x128xf32>
    %191 = arith.mulf %189, %190 : vector<4x128xf32>
    %192 = arith.addf %186, %191 : vector<4x128xf32>
    %193 = arith.addf %175, %192 : vector<4x128xf32>
    %194 = vector.extract_strided_slice %54 {offsets = [0, 33], sizes = [2, 128], strides = [1, 1]} : vector<2x162xf32> to vector<2x128xf32>
    %195 = vector.extract_strided_slice %76 {offsets = [0, 14], sizes = [4, 2], strides = [1, 1]} : vector<4x18xf32> to vector<4x2xf32>
    %196 = vector.extract_strided_slice %195 {offsets = [0, 0], sizes = [4, 1], strides = [1, 1]} : vector<4x2xf32> to vector<4x1xf32>
    %197 = vector.extract_strided_slice %194 {offsets = [0, 0], sizes = [1, 128], strides = [1, 1]} : vector<2x128xf32> to vector<1x128xf32>
    %198 = vector.broadcast %196 : vector<4x1xf32> to vector<4x128xf32>
    %199 = vector.broadcast %197 : vector<1x128xf32> to vector<4x128xf32>
    %200 = arith.mulf %198, %199 : vector<4x128xf32>
    %201 = vector.extract_strided_slice %195 {offsets = [0, 1], sizes = [4, 1], strides = [1, 1]} : vector<4x2xf32> to vector<4x1xf32>
    %202 = vector.extract_strided_slice %194 {offsets = [1, 0], sizes = [1, 128], strides = [1, 1]} : vector<2x128xf32> to vector<1x128xf32>
    %203 = vector.broadcast %201 : vector<4x1xf32> to vector<4x128xf32>
    %204 = vector.broadcast %202 : vector<1x128xf32> to vector<4x128xf32>
    %205 = arith.mulf %203, %204 : vector<4x128xf32>
    %206 = arith.addf %200, %205 : vector<4x128xf32>
    %207 = arith.addf %193, %206 : vector<4x128xf32>
    %208 = vector.extract_strided_slice %54 {offsets = [0, 34], sizes = [2, 128], strides = [1, 1]} : vector<2x162xf32> to vector<2x128xf32>
    %cst_29 = arith.constant 0.000000e+00 : f32
    %209 = vector.shape_cast %75 : vector<1x128xi1> to vector<1x128xi1>
    %210 = vector.broadcast %209 : vector<1x128xi1> to vector<2x128xi1>
    %211 = vector.broadcast %cst_29 : f32 to vector<2x128xf32>
    %212 = arith.select %210, %208, %211 : vector<2x128xi1>, vector<2x128xf32>
    %213 = vector.extract_strided_slice %76 {offsets = [0, 16], sizes = [4, 2], strides = [1, 1]} : vector<4x18xf32> to vector<4x2xf32>
    %214 = vector.extract_strided_slice %213 {offsets = [0, 0], sizes = [4, 1], strides = [1, 1]} : vector<4x2xf32> to vector<4x1xf32>
    %215 = vector.extract_strided_slice %212 {offsets = [0, 0], sizes = [1, 128], strides = [1, 1]} : vector<2x128xf32> to vector<1x128xf32>
    %216 = vector.broadcast %214 : vector<4x1xf32> to vector<4x128xf32>
    %217 = vector.broadcast %215 : vector<1x128xf32> to vector<4x128xf32>
    %218 = arith.mulf %216, %217 : vector<4x128xf32>
    %219 = vector.extract_strided_slice %213 {offsets = [0, 1], sizes = [4, 1], strides = [1, 1]} : vector<4x2xf32> to vector<4x1xf32>
    %220 = vector.extract_strided_slice %212 {offsets = [1, 0], sizes = [1, 128], strides = [1, 1]} : vector<2x128xf32> to vector<1x128xf32>
    %221 = vector.broadcast %219 : vector<4x1xf32> to vector<4x128xf32>
    %222 = vector.broadcast %220 : vector<1x128xf32> to vector<4x128xf32>
    %223 = arith.mulf %221, %222 : vector<4x128xf32>
    %224 = arith.addf %218, %223 : vector<4x128xf32>
    %225 = arith.addf %207, %224 : vector<4x128xf32>
    %c2 = arith.constant 2 : index
    %c0_30 = arith.constant 0 : index
    %226 = vector.load %arg5[%c2, %c0_30] : memref<6x1xf32, #tpu.memory_space<vmem>>, vector<4x1xf32>
    %227 = vector.broadcast %226 : vector<4x1xf32> to vector<4x128xf32>
    %228 = arith.addf %225, %227 : vector<4x128xf32>
    %cst_31 = arith.constant 1.000000e-01 : f32
    %229 = vector.broadcast %cst_31 : f32 to vector<4x128xf32>
    %230 = arith.mulf %229, %228 : vector<4x128xf32>
    %231 = arith.maximumf %228, %230 : vector<4x128xf32>
    %232 = arith.addf %231, %1 : vector<4x128xf32>
    %c0_32 = arith.constant 0 : index
    %c0_33 = arith.constant 0 : index
    %c0_34 = arith.constant 0 : index
    %233 = vector.load %arg7[%c0_32, %c0_33, %c0_34] : memref<1x4x128xf32, #tpu.memory_space<vmem>>, vector<1x4x128xf32>
    %234 = vector.shape_cast %233 : vector<1x4x128xf32> to vector<4x128xf32>
    %235 = vector.shape_cast %232 : vector<4x128xf32> to vector<1x4x128xf32>
    tpu.vector_store %arg7[%c0_32, %c0_33, %c0_34], %235 {strides = array<i32>} : memref<1x4x128xf32, #tpu.memory_space<vmem>>, vector<1x4x128xf32>,
    return
  }
  func.func @transform_0(%arg0: i32, %arg1: i32) -> (i32, i32, i32) {
    %c0_i32 = arith.constant 0 : i32
    %c0_i32_0 = arith.constant 0 : i32
    return %arg0, %c0_i32, %arg1 : i32, i32, i32
  }
  func.func @transform_1(%arg0: i32, %arg1: i32) -> (i32, i32, i32, i32) {
    %c0_i32 = arith.constant 0 : i32
    %c0_i32_0 = arith.constant 0 : i32
    %c0_i32_1 = arith.constant 0 : i32
    return %arg0, %arg1, %c0_i32, %c0_i32_0 : i32, i32, i32, i32
  }
  func.func @transform_2(%arg0: i32, %arg1: i32) -> (i32, i32) {
    %c0_i32 = arith.constant 0 : i32
    %c0_i32_0 = arith.constant 0 : i32
    %c0_i32_1 = arith.constant 0 : i32
    return %c0_i32, %c0_i32_0 : i32, i32
  }
  func.func @transform_3(%arg0: i32, %arg1: i32) -> (i32, i32) {
    %c0_i32 = arith.constant 0 : i32
    %c0_i32_0 = arith.constant 0 : i32
    %c0_i32_1 = arith.constant 0 : i32
    return %c0_i32, %c0_i32_0 : i32, i32
  }
  func.func @transform_4(%arg0: i32, %arg1: i32) -> (i32, i32) {
    %c0_i32 = arith.constant 0 : i32
    %c0_i32_0 = arith.constant 0 : i32
    %c0_i32_1 = arith.constant 0 : i32
    return %c0_i32, %c0_i32_0 : i32, i32
  }
  func.func @transform_5(%arg0: i32, %arg1: i32) -> (i32, i32, i32) {
    %c0_i32 = arith.constant 0 : i32
    %c0_i32_0 = arith.constant 0 : i32
    return %arg0, %c0_i32, %arg1 : i32, i32, i32
  }
}

</mosaic_0001>

<llo_original>
// kernel: res_block_pallas.1
$region0: #{res_block_pallas.1}
  #allocation0 [shape = 'u32[]', space=smem, size = 0x4, offset = 0x4, fixed_abs, tag = 'smem constant byte address 0x4 - core index']
  #allocation1 [shape = 'u32[72,128]{1,0:T(1,128)}', space=vmem, size = 0x9000, scoped, tag = 'internal scratch']
  %s0 = inlined_call_operand.vmem [shape: f32[2,4,256], index: 0, kind: input, shape index: {}]
  %s1 = inlined_call_operand.vmem [shape: f32[2,2,4,32], index: 1, kind: input, shape index: {}]
  %s2 = inlined_call_operand.vmem [shape: f32[2,4], index: 2, kind: input, shape index: {}]
  %s3 = inlined_call_operand.vmem [shape: f32[6,1], index: 3, kind: input, shape index: {}]
  %s4 = inlined_call_operand.vmem [shape: f32[4,18], index: 4, kind: input, shape index: {}]
  %s5 = inlined_call_operand.vmem [shape: f32[2,4,256], index: 5, kind: output, shape index: {}]
  %s6 = sld [smem:[#allocation0]]
  $region53: #{res_block_pallas.1} parent=0
    _
  %s8 = ssub.s32 1, %s6
  %s9 = scalar_select 0, %s8, %s6
  loop: start=0, step=1, limit=6
  $region2: #{res_block_pallas.1} parent=0 // loop_pre_header
    _
  $region3: #{res_block_pallas.1} parent=0 // loop_header
    %s11 = sphi 0, %s15
    %p12 = scmp.ge.s32.totalorder %s11, 6
    %s18 = sphi 0, %s30
    %s19 = sphi 0, %s26
    %s20 = sphi 0, %s18
    %s21 = sphi 0, %s19
    %s22 = sphi 0, %s20
    %s23 = sphi 0, %s21
    %s35 = sphi 0, %s37
    %s38 = sphi 0, %s35
    %s39 = sphi 0, %s38
    %s55 = sphi 0, %s39
    %s63 = sphi 0, %s65
    %s66 = sphi 0, %s63
    %s67 = sphi 0, %s66
    %s83 = sphi 0, %s67
    %s87 = sphi 0, %s87
    %s89 = sphi 0, %s87
    %s90 = sphi 0, %s89
    %s104 = sphi 0, %s90
    %s108 = sphi 0, %s108
    %s110 = sphi 0, %s108
    %s111 = sphi 0, %s110
    %s125 = sphi 0, %s111
    %s129 = sphi 0, %s129
    %s131 = sphi 0, %s129
    %s132 = sphi 0, %s131
    %s146 = sphi 0, %s132
    %s154 = sphi 0, %s156
    %s157 = sphi 0, %s154
    %s158 = sphi 0, %s157
    %s174 = sphi 0, %s158
  $region4: #{res_block_pallas.1} parent=0 // loop_header_branch
    %14 = sbr.rel (%p12) target = $region8
  $region5: #{res_block_pallas.1} parent=0 // loop_body
    %s16 = ssub.s32 %s11, 1
    %s17 = ssub.s32 %s11, 2
    %s24 = sadd.s32 1, %s19
    %p25 = scmp.ge.s32.totalorder %s24, 2
    %s26 = scalar_select %p25, 0, %s24
    %s27 = sadd.s32 1, %s18
    %s28 = scalar_select %p25, %s27, %s18
    %p29 = scmp.ge.s32.totalorder %s28, 2
    %s30 = scalar_select %p29, 0, %s28
    %s31 = ssub.s32 %s18, %s30
    %s32 = ssub.s32 %s19, %s26
    %s33 = sor.u32 %s31, %s32
    %p34 = scmp.eq.s32.totalorder %s33, 0
    %s36 = sadd.s32 %s35, 1
    %s37 = scalar_select %p34, %s35, %s36
    %p40 = pneg %p34
    %p41 = scmp.eq.s32.totalorder %s11, 3
    %p42 = por %p40, %p41
    %p43 = scmp.ne.s32.totalorder %s35, %s38
    %p44 = scmp.eq.s32.totalorder %s11, 0
    %p45 = por %p43, %p44
    %p46 = scmp.ne.s32.totalorder %s35, %s38
    %p47 = scmp.eq.s32.totalorder %s16, 3
    %p48 = por %p46, %p47
    %p49 = scmp.ne.s32.totalorder %s38, %s39
    %p50 = scmp.eq.s32.totalorder %s16, 0
    %p51 = por %p49, %p50
    %p52 = scmp.ne.s32.totalorder %s38, %s39
    %p53 = scmp.eq.s32.totalorder %s17, 3
    %p54 = por %p52, %p53
    %p56 = scmp.ne.s32.totalorder %s39, %s55
    %p57 = scmp.eq.s32.totalorder %s17, 0
    %p58 = por %p56, %p57
    %s59 = ssub.s32 %s18, %s30
    %s60 = ssub.s32 %s19, %s26
    %s61 = sor.u32 %s59, %s60
    %p62 = scmp.eq.s32.totalorder %s61, 0
    %s64 = sadd.s32 %s63, 1
    %s65 = scalar_select %p62, %s63, %s64
    %p68 = pneg %p62
    %p69 = scmp.eq.s32.totalorder %s11, 3
    %p70 = por %p68, %p69
    %p71 = scmp.ne.s32.totalorder %s63, %s66
    %p72 = scmp.eq.s32.totalorder %s11, 0
    %p73 = por %p71, %p72
    %p74 = scmp.ne.s32.totalorder %s63, %s66
    %p75 = scmp.eq.s32.totalorder %s16, 3
    %p76 = por %p74, %p75
    %p77 = scmp.ne.s32.totalorder %s66, %s67
    %p78 = scmp.eq.s32.totalorder %s16, 0
    %p79 = por %p77, %p78
    %p80 = scmp.ne.s32.totalorder %s66, %s67
    %p81 = scmp.eq.s32.totalorder %s17, 3
    %p82 = por %p80, %p81
    %p84 = scmp.ne.s32.totalorder %s67, %s83
    %p85 = scmp.eq.s32.totalorder %s17, 0
    %p86 = por %p84, %p85
    %s88 = sadd.s32 %s87, 1
    %p91 = scmp.eq.s32.totalorder %s11, 3
    %p92 = scmp.ne.s32.totalorder %s87, %s89
    %p93 = scmp.eq.s32.totalorder %s11, 0
    %p94 = por %p92, %p93
    %p95 = scmp.ne.s32.totalorder %s87, %s89
    %p96 = scmp.eq.s32.totalorder %s16, 3
    %p97 = por %p95, %p96
    %p98 = scmp.ne.s32.totalorder %s89, %s90
    %p99 = scmp.eq.s32.totalorder %s16, 0
    %p100 = por %p98, %p99
    %p101 = scmp.ne.s32.totalorder %s89, %s90
    %p102 = scmp.eq.s32.totalorder %s17, 3
    %p103 = por %p101, %p102
    %p105 = scmp.ne.s32.totalorder %s90, %s104
    %p106 = scmp.eq.s32.totalorder %s17, 0
    %p107 = por %p105, %p106
    %s109 = sadd.s32 %s108, 1
    %p112 = scmp.eq.s32.totalorder %s11, 3
    %p113 = scmp.ne.s32.totalorder %s108, %s110
    %p114 = scmp.eq.s32.totalorder %s11, 0
    %p115 = por %p113, %p114
    %p116 = scmp.ne.s32.totalorder %s108, %s110
    %p117 = scmp.eq.s32.totalorder %s16, 3
    %p118 = por %p116, %p117
    %p119 = scmp.ne.s32.totalorder %s110, %s111
    %p120 = scmp.eq.s32.totalorder %s16, 0
    %p121 = por %p119, %p120
    %p122 = scmp.ne.s32.totalorder %s110, %s111
    %p123 = scmp.eq.s32.totalorder %s17, 3
    %p124 = por %p122, %p123
    %p126 = scmp.ne.s32.totalorder %s111, %s125
    %p127 = scmp.eq.s32.totalorder %s17, 0
    %p128 = por %p126, %p127
    %s130 = sadd.s32 %s129, 1
    %p133 = scmp.eq.s32.totalorder %s11, 3
    %p134 = scmp.ne.s32.totalorder %s129, %s131
    %p135 = scmp.eq.s32.totalorder %s11, 0
    %p136 = por %p134, %p135
    %p137 = scmp.ne.s32.totalorder %s129, %s131
    %p138 = scmp.eq.s32.totalorder %s16, 3
    %p139 = por %p137, %p138
    %p140 = scmp.ne.s32.totalorder %s131, %s132
    %p141 = scmp.eq.s32.totalorder %s16, 0
    %p142 = por %p140, %p141
    %p143 = scmp.ne.s32.totalorder %s131, %s132
    %p144 = scmp.eq.s32.totalorder %s17, 3
    %p145 = por %p143, %p144
    %p147 = scmp.ne.s32.totalorder %s132, %s146
    %p148 = scmp.eq.s32.totalorder %s17, 0
    %p149 = por %p147, %p148
    %s150 = ssub.s32 %s18, %s30
    %s151 = ssub.s32 %s19, %s26
    %s152 = sor.u32 %s150, %s151
    %p153 = scmp.eq.s32.totalorder %s152, 0
    %s155 = sadd.s32 %s154, 1
    %s156 = scalar_select %p153, %s154, %s155
    %p159 = pneg %p153
    %p160 = scmp.eq.s32.totalorder %s11, 3
    %p161 = por %p159, %p160
    %p162 = scmp.ne.s32.totalorder %s154, %s157
    %p163 = scmp.eq.s32.totalorder %s11, 0
    %p164 = por %p162, %p163
    %p165 = scmp.ne.s32.totalorder %s154, %s157
    %p166 = scmp.eq.s32.totalorder %s16, 3
    %p167 = por %p165, %p166
    %p168 = scmp.ne.s32.totalorder %s157, %s158
    %p169 = scmp.eq.s32.totalorder %s16, 0
    %p170 = por %p168, %p169
    %p171 = scmp.ne.s32.totalorder %s157, %s158
    %p172 = scmp.eq.s32.totalorder %s17, 3
    %p173 = por %p171, %p172
    %p175 = scmp.ne.s32.totalorder %s158, %s174
    %p176 = scmp.eq.s32.totalorder %s17, 0
    %p177 = por %p175, %p176
    %p178 = scmp.le.s32.totalorder 1, %s11
    %p179 = scmp.lt.s32.totalorder %s11, 5
    %p180 = pnand %p178, %p179
    %p181 = pneg %p180
    // Predicated region
    $region9: #{res_block_pallas.1} parent=5 // pred_check
      _
    $region10: #{res_block_pallas.1} parent=5 // pred_check_branch
      %183 = sbr.rel (%p180) target = $region12
    $region11: #{res_block_pallas.1} parent=5 // pred_region
      %s184 = ssub.s32 %s11, 1
      // Predicated region
      $region13: #{res_block_pallas.1} parent=11 // pred_check
        %p185 = pneg %p100
      $region14: #{res_block_pallas.1} parent=11 // pred_check_branch
        %187 = sbr.rel (%p185) target = $region16
      $region15: #{res_block_pallas.1} parent=11 // pred_region
        _
      $region16: #{res_block_pallas.1} parent=11 // pred_fallthru
        _
      // Predicated region
      $region17: #{res_block_pallas.1} parent=11 // pred_check
        %p188 = pneg %p121
      $region18: #{res_block_pallas.1} parent=11 // pred_check_branch
        %190 = sbr.rel (%p188) target = $region20
      $region19: #{res_block_pallas.1} parent=11 // pred_region
        _
      $region20: #{res_block_pallas.1} parent=11 // pred_fallthru
        _
      // Predicated region
      $region21: #{res_block_pallas.1} parent=11 // pred_check
        %p191 = pneg %p142
      $region22: #{res_block_pallas.1} parent=11 // pred_check_branch
        %193 = sbr.rel (%p191) target = $region24
      $region23: #{res_block_pallas.1} parent=11 // pred_region
        _
      $region24: #{res_block_pallas.1} parent=11 // pred_fallthru
        _
    $region12: #{res_block_pallas.1} parent=5 // pred_fallthru
      _
    %p194 = scmp.lt.s32.totalorder %s11, 4
    // Predicated region
    $region25: #{res_block_pallas.1} parent=5 // pred_check
      %p195 = pneg %p194
    $region26: #{res_block_pallas.1} parent=5 // pred_check_branch
      %197 = sbr.rel (%p195) target = $region28
    $region27: #{res_block_pallas.1} parent=5 // pred_region
      // Predicated region
      $region29: #{res_block_pallas.1} parent=27 // pred_check
        %p198 = pneg %p45
      $region30: #{res_block_pallas.1} parent=27 // pred_check_branch
        %200 = sbr.rel (%p198) target = $region32
      $region31: #{res_block_pallas.1} parent=27 // pred_region
        %p201 = scmp.lt.s32.totalorder %s18, 1
        %s202 = scalar_select %p201, %s18, 1
        %p203 = scmp.lt.s32.totalorder %s19, 1
        %s204 = scalar_select %p203, %s19, 1
        %s205 = smul.addr %s202, 2
        %s206 = sadd.s32 %s204, %s205
        %s207 = smul.addr %s206, 4
        %s208 = scalar_lea.vmem %s0, %s207
      $region32: #{res_block_pallas.1} parent=27 // pred_fallthru
        _
      // Predicated region
      $region33: #{res_block_pallas.1} parent=27 // pred_check
        %p209 = pneg %p73
      $region34: #{res_block_pallas.1} parent=27 // pred_check_branch
        %211 = sbr.rel (%p209) target = $region36
      $region35: #{res_block_pallas.1} parent=27 // pred_region
        %p212 = scmp.lt.s32.totalorder %s18, 1
        %s213 = scalar_select %p212, %s18, 1
        %p214 = scmp.lt.s32.totalorder %s19, 1
        %s215 = scalar_select %p214, %s19, 1
        %s216 = smul.addr %s213, 2
        %s217 = sadd.s32 %s215, %s216
        %s218 = smul.addr %s217, 4
        %s219 = scalar_lea.vmem %s1, %s218
      $region36: #{res_block_pallas.1} parent=27 // pred_fallthru
        _
    $region28: #{res_block_pallas.1} parent=5 // pred_fallthru
      _
    %p220 = scmp.le.s32.totalorder 1, %s11
    %p221 = scmp.lt.s32.totalorder %s11, 5
    %p222 = pnand %p220, %p221
    %p223 = pneg %p222
    // Predicated region
    $region37: #{res_block_pallas.1} parent=5 // pred_check
      _
    $region38: #{res_block_pallas.1} parent=5 // pred_check_branch
      %225 = sbr.rel (%p222) target = $region40
    $region39: #{res_block_pallas.1} parent=5 // pred_region
      %s226 = ssub.s32 %s11, 1
      %p227 = scmp.lt.s32.totalorder %s20, 1
      %s228 = scalar_select %p227, %s20, 1
      %p229 = scmp.lt.s32.totalorder %s21, 1
      %s230 = scalar_select %p229, %s21, 1
      %s231 = smul.addr %s228, 2
      %s232 = sadd.s32 %s230, %s231
      %s233 = smul.addr %s232, 4
      %s234 = scalar_lea.vmem %s0, %s233
      %p235 = pneg %p51
      %p236 = pneg %p48
      %p237 = scmp.lt.s32.totalorder %s20, 1
      %s238 = scalar_select %p237, %s20, 1
      %p239 = scmp.lt.s32.totalorder %s21, 1
      %s240 = scalar_select %p239, %s21, 1
      %s241 = smul.addr %s238, 2
      %s242 = sadd.s32 %s240, %s241
      %s243 = smul.addr %s242, 4
      %s244 = scalar_lea.vmem %s1, %s243
      %p245 = pneg %p79
      %p246 = pneg %p76
      %p247 = pneg %p100
      %p248 = pneg %p97
      %p249 = pneg %p121
      %p250 = pneg %p118
      %p251 = pneg %p142
      %p252 = pneg %p139
      %p253 = pneg %p170
      %p254 = pneg %p167
      %p255 = scmp.lt.s32.totalorder %s20, 1
      %s256 = scalar_select %p255, %s20, 1
      %p257 = scmp.lt.s32.totalorder %s21, 1
      %s258 = scalar_select %p257, %s21, 1
      %s259 = smul.addr %s256, 2
      %s260 = sadd.s32 %s258, %s259
      %s261 = smul.addr %s260, 4
      %s262 = scalar_lea.vmem %s5, %s261
      %p263 = scmp.lt.s32.totalorder %s20, 1
      %s264 = scalar_select %p263, %s20, 1
      %p265 = scmp.lt.s32.totalorder %s21, 1
      %s266 = scalar_select %p265, %s21, 1
      %s267 = smul.addr %s264, 2
      %s268 = sadd.s32 %s266, %s267
      %s269 = smul.addr %s268, 4
      %s270 = scalar_lea.vmem %s0, %s269
      %p271 = scmp.lt.s32.totalorder %s20, 1
      %s272 = scalar_select %p271, %s20, 1
      %p273 = scmp.lt.s32.totalorder %s21, 1
      %s274 = scalar_select %p273, %s21, 1
      %s275 = smul.addr %s272, 2
      %s276 = sadd.s32 %s274, %s275
      %s277 = smul.addr %s276, 4
      %s278 = scalar_lea.vmem %s1, %s277
      %p279 = scmp.lt.s32.totalorder %s20, 1
      %s280 = scalar_select %p279, %s20, 1
      %p281 = scmp.lt.s32.totalorder %s21, 1
      %s282 = scalar_select %p281, %s21, 1
      %s283 = smul.addr %s280, 2
      %s284 = sadd.s32 %s282, %s283
      %s285 = smul.addr %s284, 4
      %s286 = scalar_lea.vmem %s5, %s285
      %v287 = vld [vmem:[%s270] sm:$0xf]
      %v288 = vld [vmem:[%s278] sm:$0xf]
      %290 = vrot.lane.b32.xlu0 %v287, 16
      %v291 = vpop.permute.xlu0 %290
      %vm293 = vcmask 130048
      %v294 = vsel %vm293, %v288, %v291
      %v295 = vsel %vm293, %v291, %v288
      %v296 = vld [vmem:[%s2] sm:$0x3]
      %298 = vset.pattern.permute.xlu0 0
      %299 = vperm.xlu0 %298, %v296
      %v300 = vpop.permute.xlu0 %299
      %v302 = vperm.slane %v294, 0
      %v303 = vperm.slane %v295, 0
      %v304 = vmul.f32 %v300, %v302
      %v305 = vmul.f32 %v300, %v303
      %306 = vset.pattern.permute.xlu0 1
      %307 = vperm.xlu0 %306, %v296
      %v308 = vpop.permute.xlu0 %307
      %v310 = vperm.slane %v294, 1
      %v311 = vperm.slane %v295, 1
      %v312 = vmul.f32 %v308, %v310
      %v313 = vmul.f32 %v308, %v311
      %v314 = vadd.f32 %v304, %v312
      %v315 = vadd.f32 %v305, %v313
      %316 = vset.pattern.permute.xlu0 2
      %317 = vperm.xlu0 %316, %v296
      %v318 = vpop.permute.xlu0 %317
      %v320 = vperm.slane %v294, 2
      %v321 = vperm.slane %v295, 2
      %v322 = vmul.f32 %v318, %v320
      %v323 = vmul.f32 %v318, %v321
      %v324 = vadd.f32 %v314, %v322
      %v325 = vadd.f32 %v315, %v323
      %326 = vset.pattern.permute.xlu0 3
      %327 = vperm.xlu0 %326, %v296
      %v328 = vpop.permute.xlu0 %327
      %v330 = vperm.slane %v294, 3
      %v331 = vperm.slane %v295, 3
      %v332 = vmul.f32 %v328, %v330
      %v333 = vmul.f32 %v328, %v331
      %v334 = vadd.f32 %v324, %v332
      %v335 = vadd.f32 %v325, %v333
      %v336 = vld [vmem:[%s3] sm:$0x3]
      %338 = vset.pattern.permute.xlu0 0
      %339 = vperm.xlu0 %338, %v336
      %v340 = vpop.permute.xlu0 %339
      %v342 = vadd.f32 %v334, %v340
      %v343 = vadd.f32 %v335, %v340
      %v344 = vmul.f32 %v342, 0.1
      %v345 = vmul.f32 %v343, 0.1
      %v346 = vmax.f32 %v342, %v344
      %v347 = vmax.f32 %v343, %v345
      %v348 = vlaneseq
      %v349 = vand.u32 %v348, 127
      %v350 = vadd.s32 %v349, 128
      %p351 = scmp.eq.s32.totalorder %s21, 0
      %vm352 = vcmp.lt.s32.totalorder %v349, 16
      %vm353 = vcmp.lt.s32.totalorder %v350, 16
      %s354 = scalar_select %p351, 1, 0
      %v355 = vstv %s354
      %vm356 = vcmp.eq.s32.totalorder %v355, 1
      %vm357 = vmand %vm356, %vm352
      %vm358 = vmand %vm356, %vm353
      %p359 = scmp.eq.s32.totalorder %s21, 1
      %vm360 = vcmp.ge.s32.totalorder %v349, 144
      %vm361 = vcmp.ge.s32.totalorder %v350, 144
      %s362 = scalar_select %p359, 1, 0
      %v363 = vstv %s362
      %vm364 = vcmp.eq.s32.totalorder %v363, 1
      %vm365 = vmand %vm364, %vm360
      %vm366 = vmand %vm364, %vm361
      %vm367 = vmor %vm357, %vm365
      %vm368 = vmor %vm358, %vm366
      %v369 = vsel %vm367, 1, 0
      %v370 = vsel %vm368, 1, 0
      %vm371 = vcmp.eq.s32.totalorder %v369, 1
      %vm372 = vcmp.eq.s32.totalorder %v370, 1
      %v373 = vsel %vm371, 0.0, %v346
      %v374 = vsel %vm372, 0.0, %v347
      %377 = vrot.lane.b32.xlu0 %v373, 1
      %v378 = vpop.permute.xlu0 %377
      %379 = vrot.lane.b32.xlu0 %v374, 1
      %v380 = vpop.permute.xlu0 %379
      %vm381 = vcmask 7168
      %v382 = vsel %vm381, %v378, %v380
      %v385 = vsel %vm381, 0.0, %v378
      %vm386 = vcmask 269312
      %v387 = vsel %vm386, %v382, 0.0
      %vm388 = vcmp.lt.s32.totalorder %v349, 0
      %v389 = vsub.s32 0, %v349
      %v390 = vsel %vm388, %v389, %v349
      %v391 = vshrl.u32 %v390, 4
      %v392 = vand.u32 %v390, 15
      %v393 = vsub.s32 0, %v392
      %v394 = vsel %vm388, %v393, %v392
      %vm395 = vcmp.ne.s32.totalorder %v394, 0
      %vm396 = vcmp.lt.s32.totalorder %v394, 0
      %vm397 = vmand %vm396, %vm395
      %v398 = vadd.s32 %v394, 16
      %v399 = vsel %vm397, %v398, %v394
      %vm400 = vcmp.ge.s32.totalorder %v399, 1
      %vm401 = vcmp.le.s32.totalorder %v399, 14
      %v402 = vld [vmem:[%s4] sm:$0xf]
      %v403 = vsel %vm400, 1, 0
      %vm404 = vcmp.eq.s32.totalorder %v403, 1
      %v405 = vsel %vm404, %v385, 0.0
      %407 = vset.pattern.permute.xlu0 0
      %408 = vperm.xlu0 %407, %v402
      %v409 = vpop.permute.xlu0 %408
      %v411 = vperm.slane %v405, 0
      %v412 = vmul.f32 %v409, %v411
      %413 = vset.pattern.permute.xlu0 1
      %414 = vperm.xlu0 %413, %v402
      %v415 = vpop.permute.xlu0 %414
      %v417 = vperm.slane %v405, 1
      %v418 = vmul.f32 %v415, %v417
      %v419 = vadd.f32 %v412, %v418
      %420 = vset.pattern.permute.xlu0 2
      %421 = vperm.xlu0 %420, %v402
      %v422 = vpop.permute.xlu0 %421
      %v424 = vperm.slane %v385, 0
      %v425 = vperm.slane %v387, 0
      %v426 = vmul.f32 %v422, %v424
      %v427 = vmul.f32 %v422, %v425
      %428 = vset.pattern.permute.xlu0 3
      %429 = vperm.xlu0 %428, %v402
      %v430 = vpop.permute.xlu0 %429
      %v432 = vperm.slane %v385, 1
      %v433 = vperm.slane %v387, 1
      %v434 = vmul.f32 %v430, %v432
      %v435 = vmul.f32 %v430, %v433
      %v436 = vadd.f32 %v426, %v434
      %v437 = vadd.f32 %v427, %v435
      %440 = vrot.lane.b32.xlu0 %v436, 127
      %v441 = vpop.permute.xlu0 %440
      %442 = vrot.lane.b32.xlu0 %v437, 127
      %v443 = vpop.permute.xlu0 %442
      %vm444 = vcmask 1039360
      %v445 = vsel %vm444, %v441, %v443
      %v447 = vadd.f32 %v419, %v445
      %v448 = vsel %vm401, 1, 0
      %vm449 = vcmp.eq.s32.totalorder %v448, 1
      %452 = vrot.lane.b32.xlu0 %v385, 126
      %v453 = vpop.permute.xlu0 %452
      %454 = vrot.lane.b32.xlu0 %v387, 126
      %v455 = vpop.permute.xlu0 %454
      %vm456 = vcmask 1031168
      %v457 = vsel %vm456, %v453, %v455
      %v459 = vsel %vm449, %v457, 0.0
      %460 = vset.pattern.permute.xlu0 4
      %461 = vperm.xlu0 %460, %v402
      %v462 = vpop.permute.xlu0 %461
      %v464 = vperm.slane %v459, 0
      %v465 = vmul.f32 %v462, %v464
      %466 = vset.pattern.permute.xlu0 5
      %467 = vperm.xlu0 %466, %v402
      %v468 = vpop.permute.xlu0 %467
      %v470 = vperm.slane %v459, 1
      %v471 = vmul.f32 %v468, %v470
      %v472 = vadd.f32 %v465, %v471
      %v473 = vadd.f32 %v447, %v472
      %474 = vrot.lane.b32.xlu0 %v385, 112
      %v475 = vpop.permute.xlu0 %474
      %476 = vrot.lane.b32.xlu0 %v387, 112
      %v477 = vpop.permute.xlu0 %476
      %vm478 = vcmask 916480
      %v479 = vsel %vm478, %v475, %v477
      %v481 = vsel %vm404, %v479, 0.0
      %482 = vset.pattern.permute.xlu0 6
      %483 = vperm.xlu0 %482, %v402
      %v484 = vpop.permute.xlu0 %483
      %v486 = vperm.slane %v481, 0
      %v487 = vmul.f32 %v484, %v486
      %488 = vset.pattern.permute.xlu0 7
      %489 = vperm.xlu0 %488, %v402
      %v490 = vpop.permute.xlu0 %489
      %v492 = vperm.slane %v481, 1
      %v493 = vmul.f32 %v490, %v492
      %v494 = vadd.f32 %v487, %v493
      %v495 = vadd.f32 %v473, %v494
      %496 = vset.pattern.permute.xlu0 8
      %497 = vperm.xlu0 %496, %v402
      %v498 = vpop.permute.xlu0 %497
      %v500 = vmul.f32 %v498, %v424
      %v501 = vmul.f32 %v498, %v425
      %502 = vset.pattern.permute.xlu0 9
      %503 = vperm.xlu0 %502, %v402
      %v504 = vpop.permute.xlu0 %503
      %v506 = vmul.f32 %v504, %v432
      %v507 = vmul.f32 %v504, %v433
      %v508 = vadd.f32 %v500, %v506
      %v509 = vadd.f32 %v501, %v507
      %512 = vrot.lane.b32.xlu0 %v508, 111
      %v513 = vpop.permute.xlu0 %512
      %514 = vrot.lane.b32.xlu0 %v509, 111
      %v515 = vpop.permute.xlu0 %514
      %vm516 = vcmask 908288
      %v517 = vsel %vm516, %v513, %v515
      %v519 = vadd.f32 %v495, %v517
      %520 = vrot.lane.b32.xlu0 %v385, 110
      %v521 = vpop.permute.xlu0 %520
      %522 = vrot.lane.b32.xlu0 %v387, 110
      %v523 = vpop.permute.xlu0 %522
      %vm524 = vcmask 900096
      %v525 = vsel %vm524, %v521, %v523
      %v527 = vsel %vm449, %v525, 0.0
      %528 = vset.pattern.permute.xlu0 10
      %529 = vperm.xlu0 %528, %v402
      %v530 = vpop.permute.xlu0 %529
      %v532 = vperm.slane %v527, 0
      %v533 = vmul.f32 %v530, %v532
      %534 = vset.pattern.permute.xlu0 11
      %535 = vperm.xlu0 %534, %v402
      %v536 = vpop.permute.xlu0 %535
      %v538 = vperm.slane %v527, 1
      %v539 = vmul.f32 %v536, %v538
      %v540 = vadd.f32 %v533, %v539
      %v541 = vadd.f32 %v519, %v540
      %542 = vrot.lane.b32.xlu0 %v385, 96
      %v543 = vpop.permute.xlu0 %542
      %544 = vrot.lane.b32.xlu0 %v387, 96
      %v545 = vpop.permute.xlu0 %544
      %vm546 = vcmask 785408
      %v547 = vsel %vm546, %v543, %v545
      %v549 = vsel %vm404, %v547, 0.0
      %550 = vset.pattern.permute.xlu0 12
      %551 = vperm.xlu0 %550, %v402
      %v552 = vpop.permute.xlu0 %551
      %v554 = vperm.slane %v549, 0
      %v555 = vmul.f32 %v552, %v554
      %556 = vset.pattern.permute.xlu0 13
      %557 = vperm.xlu0 %556, %v402
      %v558 = vpop.permute.xlu0 %557
      %v560 = vperm.slane %v549, 1
      %v561 = vmul.f32 %v558, %v560
      %v562 = vadd.f32 %v555, %v561
      %v563 = vadd.f32 %v541, %v562
      %564 = vset.pattern.permute.xlu0 14
      %565 = vperm.xlu0 %564, %v402
      %v566 = vpop.permute.xlu0 %565
      %v568 = vmul.f32 %v566, %v424
      %v569 = vmul.f32 %v566, %v425
      %570 = vset.pattern.permute.xlu0 15
      %571 = vperm.xlu0 %570, %v402
      %v572 = vpop.permute.xlu0 %571
      %v574 = vmul.f32 %v572, %v432
      %v575 = vmul.f32 %v572, %v433
      %v576 = vadd.f32 %v568, %v574
      %v577 = vadd.f32 %v569, %v575
      %580 = vrot.lane.b32.xlu0 %v576, 95
      %v581 = vpop.permute.xlu0 %580
      %582 = vrot.lane.b32.xlu0 %v577, 95
      %v583 = vpop.permute.xlu0 %582
      %vm584 = vcmask 777216
      %v585 = vsel %vm584, %v581, %v583
      %v587 = vadd.f32 %v563, %v585
      %588 = vrot.lane.b32.xlu0 %v385, 94
      %v589 = vpop.permute.xlu0 %588
      %590 = vrot.lane.b32.xlu0 %v387, 94
      %v591 = vpop.permute.xlu0 %590
      %vm592 = vcmask 769024
      %v593 = vsel %vm592, %v589, %v591
      %v595 = vsel %vm449, %v593, 0.0
      %596 = vset.pattern.permute.xlu0 16
      %597 = vperm.xlu0 %596, %v402
      %v598 = vpop.permute.xlu0 %597
      %v600 = vperm.slane %v595, 0
      %v601 = vmul.f32 %v598, %v600
      %602 = vset.pattern.permute.xlu0 17
      %603 = vperm.xlu0 %602, %v402
      %v604 = vpop.permute.xlu0 %603
      %v606 = vperm.slane %v595, 1
      %v607 = vmul.f32 %v604, %v606
      %v608 = vadd.f32 %v601, %v607
      %v609 = vadd.f32 %v587, %v608
      %v610 = vld [vmem:[%s3 + $0x2] sm:$0xf]
      %612 = vset.pattern.permute.xlu0 0
      %613 = vperm.xlu0 %612, %v610
      %v614 = vpop.permute.xlu0 %613
      %v616 = vadd.f32 %v609, %v614
      %v617 = vmul.f32 %v616, 0.1
      %v618 = vmax.f32 %v616, %v617
      %v619 = vadd.f32 %v618, %v287
      %620 = vst [vmem:[%s286] sm:$0xf] %v619
      %p621 = scmp.lt.s32.totalorder %s20, 1
      %s622 = scalar_select %p621, %s20, 1
      %p623 = scmp.lt.s32.totalorder %s21, 1
      %s624 = scalar_select %p623, %s21, 1
      %s625 = smul.addr %s622, 2
      %s626 = sadd.s32 %s624, %s625
      %s627 = smul.addr %s626, 4
      %s628 = scalar_lea.vmem %s5, %s627
      // Predicated region
      $region41: #{res_block_pallas.1} parent=39 // pred_check
        %p629 = pneg %p167
      $region42: #{res_block_pallas.1} parent=39 // pred_check_branch
        %631 = sbr.rel (%p629) target = $region44
      $region43: #{res_block_pallas.1} parent=39 // pred_region
        _
      $region44: #{res_block_pallas.1} parent=39 // pred_fallthru
        _
    $region40: #{res_block_pallas.1} parent=5 // pred_fallthru
      _
    %p632 = scmp.le.s32.totalorder 2, %s11
    // Predicated region
    $region45: #{res_block_pallas.1} parent=5 // pred_check
      %p633 = pneg %p632
    $region46: #{res_block_pallas.1} parent=5 // pred_check_branch
      %635 = sbr.rel (%p633) target = $region48
    $region47: #{res_block_pallas.1} parent=5 // pred_region
      %s636 = ssub.s32 %s11, 2
      // Predicated region
      $region49: #{res_block_pallas.1} parent=47 // pred_check
        %p637 = pneg %p173
      $region50: #{res_block_pallas.1} parent=47 // pred_check_branch
        %639 = sbr.rel (%p637) target = $region52
      $region51: #{res_block_pallas.1} parent=47 // pred_region
        %p640 = scmp.lt.s32.totalorder %s22, 1
        %s641 = scalar_select %p640, %s22, 1
        %p642 = scmp.lt.s32.totalorder %s23, 1
        %s643 = scalar_select %p642, %s23, 1
        %s644 = smul.addr %s641, 2
        %s645 = sadd.s32 %s643, %s644
        %s646 = smul.addr %s645, 4
        %s647 = scalar_lea.vmem %s5, %s646
      $region52: #{res_block_pallas.1} parent=47 // pred_fallthru
        _
    $region48: #{res_block_pallas.1} parent=5 // pred_fallthru
      _
  $region6: #{res_block_pallas.1} parent=0 // loop_footer
    %s15 = sadd.s32 1, %s11
  $region7: #{res_block_pallas.1} parent=0 // loop_footer_branch
    %10 = sbr.rel target = $region3
  $region8: #{res_block_pallas.1} parent=0 // loop_exit
    _

</llo_original>
